<compile_context>
chip_gen: v5e
topology: v5e:2x2
jax: 0.10.0
libtpu: 0.0.40
codegen_flags: <defaults>
</compile_context>

<pallas_src>
import jax
import jax.numpy as jnp
from jax.experimental import pallas as pl
from jax.experimental.pallas import tpu as pltpu


def _round_up(n, m):
    return (n + m - 1) // m * m


# ---------------------------------------------------------------------------
# Pallas kernel: out = x @ W + b   (K-tiled matmul, f32 accumulator scratch)
# ---------------------------------------------------------------------------
def _matmul_bias_kernel(x_ref, w_ref, b_ref, o_ref, acc_ref):
    k = pl.program_id(2)

    @pl.when(k == 0)
    def _init():
        acc_ref[...] = jnp.zeros_like(acc_ref)

    acc_ref[...] += jnp.dot(
        x_ref[...], w_ref[...], preferred_element_type=jnp.float32
    )

    @pl.when(k == pl.num_programs(2) - 1)
    def _finalize():
        # Bias is broadcast exactly once, in the finalize phase.
        o_ref[...] = (acc_ref[...] + b_ref[...]).astype(o_ref.dtype)


def _matmul_bias(x, w, b2, *, tm=256, tn=128, tk=512):
    """x:(B,K) @ w:(K,N) + b2:(1,N) -> (B,N), tiled & pipelined on TPU."""
    B, K = x.shape
    Kw, N = w.shape
    assert K == Kw and b2.shape == (1, N)

    # Full-dimension fallback keeps every BlockSpec legal for tiny / ragged
    # dims (last two block dims must be (8,128)-divisible OR span the array).
    tm = B if (B <= tm or B % tm) else tm
    tn = N if (N <= tn or N % tn) else tn
    tk = K if (K <= tk or K % tk) else tk
    grid = (B // tm, N // tn, K // tk)

    return pl.pallas_call(
        _matmul_bias_kernel,
        out_shape=jax.ShapeDtypeStruct((B, N), jnp.float32),
        grid_spec=pltpu.PrefetchScalarGridSpec(
            num_scalar_prefetch=0,
            grid=grid,
            in_specs=[
                pl.BlockSpec((tm, tk), lambda i, j, k: (i, k)),
                pl.BlockSpec((tk, tn), lambda i, j, k: (k, j)),
                pl.BlockSpec((1, tn), lambda i, j, k: (0, j)),
            ],
            out_specs=pl.BlockSpec((tm, tn), lambda i, j, k: (i, j)),
            scratch_shapes=[pltpu.VMEM((tm, tn), jnp.float32)],
        ),
        compiler_params=pltpu.CompilerParams(
            dimension_semantics=("parallel", "parallel", "arbitrary"),
        ),
    )(x, w, b2)


# ---------------------------------------------------------------------------
# Init-time algebraic fold of the whole hybrid_block into (W_comb, b_comb)
# ---------------------------------------------------------------------------
def fold_hybrid_block_params(w_e, b_e, w_d, b_d, w_l, b_l, seg_length):
    """out = linear(x) + linear(seg_e(x)) + linear(perm_seg_d(x))
           = x @ W_comb + b_comb   (exact linear-algebra identity)."""
    S = seg_length
    O, F = w_l.shape
    G = F // S
    assert G * S == F, "in_features must be divisible by seg_length"

    wl_t = w_l.T                                   # (F, O)
    wl_r = wl_t.reshape(G, S, O)                   # [g, u, o]

    # --- E branch: per-segment Linear(S,S), no permutation -----------------
    w_e_fold = jnp.einsum("ut,guo->gto", w_e, wl_r).reshape(F, O)
    b_e_fold = jnp.einsum("u,guo->o", b_e, wl_r)

    # --- D branch: permute -> per-segment Linear(S,S) -> permute back ------
    # Output-side permutation (reshape(B,S,G).permute back) folded into W_l:
    v2 = wl_r.transpose(1, 0, 2).reshape(G, S, O)  # [g', u, o]
    w_dv = jnp.einsum("ut,guo->gto", w_d, v2)      # [g', t, o]
    b_d_fold = jnp.einsum("u,guo->o", b_d, v2)
    # Input-side permutation (permute(0,2,1).reshape(B,G,S)):
    w_d_fold = w_dv.reshape(S, G, O).transpose(1, 0, 2).reshape(F, O)

    w_comb = wl_t + w_e_fold + w_d_fold            # (F, O)
    b_comb = 3.0 * b_l + b_e_fold + b_d_fold       # (O,)
    return w_comb, b_comb


# ---------------------------------------------------------------------------
# Parameter init (PyTorch nn.Linear-style uniform bounds) + fold + lane pad
# ---------------------------------------------------------------------------
def init_params(key, in_features, out_features, seg_length):
    ks = jax.random.split(key, 6)
    S = seg_length

    def unif(k, shape, fan_in):
        bound = 1.0 / jnp.sqrt(jnp.float32(fan_in))
        return jax.random.uniform(k, shape, jnp.float32, -bound, bound)

    w_d = unif(ks[0], (S, S), S)                                 # proj_d.weight
    b_d = unif(ks[1], (S,), S)
    w_e = unif(ks[2], (S, S), S)                                 # proj_e.weight
    b_e = unif(ks[3], (S,), S)
    w_l = unif(ks[4], (out_features, in_features), in_features)  # linear.weight
    b_l = unif(ks[5], (out_features,), in_features)

    w_comb, b_comb = fold_hybrid_block_params(w_e, b_e, w_d, b_d, w_l, b_l, S)

    # Pad out_features to a multiple of 128 so the kernel's HBM store is
    # lane-dense (unmasked vst) on all generations.
    n_pad = _round_up(out_features, 128)
    w_comb_pad = jnp.pad(w_comb, ((0, 0), (0, n_pad - out_features)))
    b_comb_pad = jnp.pad(b_comb, (0, n_pad - out_features)).reshape(1, n_pad)

    return {
        "seg_length": S,
        "out_features": out_features,
        "w_comb_pad": w_comb_pad,
        "b_comb_pad": b_comb_pad,
        # Raw weights kept only for the pure-JAX reference check.
        "_w_d": w_d, "_b_d": b_d, "_w_e": w_e, "_b_e": b_e,
        "_w_l": w_l, "_b_l": b_l,
    }


# ---------------------------------------------------------------------------
# Forward: one Pallas call
# ---------------------------------------------------------------------------
def hybrid_block_forward(x, params):
    out = _matmul_bias(x, params["w_comb_pad"], params["b_comb_pad"])
    return out[:, : params["out_features"]]


# ---------------------------------------------------------------------------
# Faithful pure-JAX reference (mirrors the PyTorch forward exactly)
# ---------------------------------------------------------------------------
def reference_forward(x, params):
    S = params["seg_length"]
    B, F = x.shape
    G = F // S
    w_d, b_d = params["_w_d"], params["_b_d"]
    w_e, b_e = params["_w_e"], params["_b_e"]
    w_l, b_l = params["_w_l"], params["_b_l"]

    def linear(v, w, b):
        return v @ w.T + b

    # segmentation_linear_block
    x_e = linear(x.reshape(B, G, S), w_e, b_e).reshape(B, F)
    # permute_segmentation_linear_block
    x_d = x.reshape(B, G, S).transpose(0, 2, 1).reshape(B, G, S)
    x_d = linear(x_d, w_d, b_d)
    x_d = x_d.reshape(B, S, G).transpose(0, 2, 1).reshape(B, F)

    return linear(x, w_l, b_l) + linear(x_e, w_l, b_l) + linear(x_d, w_l, b_l)


if __name__ == "__main__":
    SEG_LENGTH = 7
    IN_FEATURES = 56      # 8 segments of length 7
    OUT_FEATURES = 56
    BATCH = 2

    key = jax.random.PRNGKey(0)
    k_params, k_x = jax.random.split(key)
    params = init_params(k_params, IN_FEATURES, OUT_FEATURES, SEG_LENGTH)
    x = jax.random.normal(k_x, (BATCH, IN_FEATURES), jnp.float32)

    out = jax.block_until_ready(hybrid_block_forward(x, params))

    ref = reference_forward(x, params)
    assert out.shape == (BATCH, OUT_FEATURES)
    assert jnp.allclose(out, ref, atol=1e-4, rtol=1e-4), "mismatch vs reference"

    print("KERNEL_OK")
</pallas_src>

<mosaic_0001>
module attributes {stable_mosaic.version = 11 : i64} {
  func.func @_matmul_bias_kernel(%arg0: i32, %arg1: i32, %arg2: i32, %arg3: memref<2x56xf32, #tpu.memory_space<vmem>>, %arg4: memref<56x128xf32, #tpu.memory_space<vmem>>, %arg5: memref<1x128xf32, #tpu.memory_space<vmem>>, %arg6: memref<2x128xf32, #tpu.memory_space<vmem>>, %arg7: memref<2x128xf32, #tpu.memory_space<vmem>>) attributes {dimension_semantics = [#tpu.dimension_semantics<parallel>, #tpu.dimension_semantics<parallel>, #tpu.dimension_semantics<arbitrary>], iteration_bounds = array<i64: 1, 1, 1>, scalar_prefetch = 0 : i64, scratch_operands = 1 : i64, tpu.core_type = #tpu.core_type<tc>, window_params = [{transform_indices = @transform_0, window_bounds = array<i64: 2, 56>}, {transform_indices = @transform_1, window_bounds = array<i64: 56, 128>}, {transform_indices = @transform_2, window_bounds = array<i64: 1, 128>}, {transform_indices = @transform_3, window_bounds = array<i64: 2, 128>}]} {
    %c0_i32 = arith.constant 0 : i32
    %0 = arith.cmpi eq, %arg2, %c0_i32 : i32
    %1 = arith.extui %0 : i1 to i32
    %c0_i32_0 = arith.constant 0 : i32
    %2 = arith.cmpi ne, %1, %c0_i32_0 : i32
    scf.if %2 {
      %cst_10 = arith.constant 0.000000e+00 : f32
      %12 = vector.broadcast %cst_10 : f32 to vector<2x128xf32>
      %c0_11 = arith.constant 0 : index
      %c0_12 = arith.constant 0 : index
      %13 = vector.load %arg7[%c0_11, %c0_12] : memref<2x128xf32, #tpu.memory_space<vmem>>, vector<2x128xf32>
      tpu.vector_store %arg7[%c0_11, %c0_12], %12 {strides = array<i32>} : memref<2x128xf32, #tpu.memory_space<vmem>>, vector<2x128xf32>,
    } else {
    }
    %c0 = arith.constant 0 : index
    %c0_1 = arith.constant 0 : index
    %3 = vector.load %arg7[%c0, %c0_1] : memref<2x128xf32, #tpu.memory_space<vmem>>, vector<2x128xf32>
    %c0_2 = arith.constant 0 : index
    %c0_3 = arith.constant 0 : index
    %4 = vector.load %arg3[%c0_2, %c0_3] : memref<2x56xf32, #tpu.memory_space<vmem>>, vector<2x56xf32>
    %c0_4 = arith.constant 0 : index
    %c0_5 = arith.constant 0 : index
    %5 = vector.load %arg4[%c0_4, %c0_5] : memref<56x128xf32, #tpu.memory_space<vmem>>, vector<56x128xf32>
    %cst = arith.constant dense<0.000000e+00> : vector<2x128xf32>
    %6 = tpu.matmul %4, %5, %cst {dimension_numbers = #tpu.dot_dimension_numbers<[1], [0], [0], [1], [0, 0, 1, 1], [], []>} : vector<2x56xf32>, vector<56x128xf32>, vector<2x128xf32> -> vector<2x128xf32>
    %7 = arith.addf %3, %6 : vector<2x128xf32>
    %c0_6 = arith.constant 0 : index
    %c0_7 = arith.constant 0 : index
    %8 = vector.load %arg7[%c0_6, %c0_7] : memref<2x128xf32, #tpu.memory_space<vmem>>, vector<2x128xf32>
    tpu.vector_store %arg7[%c0_6, %c0_7], %7 {strides = array<i32>} : memref<2x128xf32, #tpu.memory_space<vmem>>, vector<2x128xf32>,
    %c0_i32_8 = arith.constant 0 : i32
    %9 = arith.cmpi eq, %arg2, %c0_i32_8 : i32
    %10 = arith.extui %9 : i1 to i32
    %c0_i32_9 = arith.constant 0 : i32
    %11 = arith.cmpi ne, %10, %c0_i32_9 : i32
    scf.if %11 {
      %c0_10 = arith.constant 0 : index
      %c0_11 = arith.constant 0 : index
      %12 = vector.load %arg7[%c0_10, %c0_11] : memref<2x128xf32, #tpu.memory_space<vmem>>, vector<2x128xf32>
      %c0_12 = arith.constant 0 : index
      %c0_13 = arith.constant 0 : index
      %13 = vector.load %arg5[%c0_12, %c0_13] : memref<1x128xf32, #tpu.memory_space<vmem>>, vector<1x128xf32>
      %14 = vector.broadcast %13 : vector<1x128xf32> to vector<2x128xf32>
      %15 = arith.addf %12, %14 : vector<2x128xf32>
      %c0_14 = arith.constant 0 : index
      %c0_15 = arith.constant 0 : index
      %16 = vector.load %arg6[%c0_14, %c0_15] : memref<2x128xf32, #tpu.memory_space<vmem>>, vector<2x128xf32>
      tpu.vector_store %arg6[%c0_14, %c0_15], %15 {strides = array<i32>} : memref<2x128xf32, #tpu.memory_space<vmem>>, vector<2x128xf32>,
    } else {
    }
    return
  }
  func.func @transform_0(%arg0: i32, %arg1: i32, %arg2: i32) -> (i32, i32) {
    %c0_i32 = arith.constant 0 : i32
    return %arg0, %arg2 : i32, i32
  }
  func.func @transform_1(%arg0: i32, %arg1: i32, %arg2: i32) -> (i32, i32) {
    %c0_i32 = arith.constant 0 : i32
    return %arg2, %arg1 : i32, i32
  }
  func.func @transform_2(%arg0: i32, %arg1: i32, %arg2: i32) -> (i32, i32) {
    %c0_i32 = arith.constant 0 : i32
    %c0_i32_0 = arith.constant 0 : i32
    return %c0_i32, %arg1 : i32, i32
  }
  func.func @transform_3(%arg0: i32, %arg1: i32, %arg2: i32) -> (i32, i32) {
    %c0_i32 = arith.constant 0 : i32
    return %arg0, %arg1 : i32, i32
  }
}

</mosaic_0001>

<llo_original>
// kernel: tpu_custom_call.1
$region0: #{tpu_custom_call.1}
  #allocation0 [shape = 'u32[]', space=smem, size = 0x4, offset = 0x4, fixed_abs, tag = 'smem constant byte address 0x4 - core index']
  #allocation1 [shape = 'u32[72,128]{1,0:T(1,128)}', space=vmem, size = 0x9000, scoped, tag = 'internal scratch']
  #allocation2 [shape = 'f32[2,128]{1,0:T(2,128)}', space=vmem, size = 0x400, scoped, tag = 'scratch operand']
  %s0 = inlined_call_operand.hbm [shape: f32[2,56], index: 0, kind: input, shape index: {}]
  %s1 = inlined_call_operand.hbm [shape: f32[56,128], index: 1, kind: input, shape index: {}]
  %s2 = inlined_call_operand.vmem [shape: f32[1,128], index: 2, kind: input, shape index: {}]
  %s3 = inlined_call_operand.hbm [shape: f32[2,128], index: 3, kind: output, shape index: {}]
  %s4 = sld [smem:[#allocation0]]
  $region38: #{tpu_custom_call.1} parent=0
    _
  %s6 = ssub.s32 1, %s4
  %s7 = scalar_select 0, %s6, %s4
  $region1: #{tpu_custom_call.1} parent=0
    #allocation3 [shape = 'u8[1024]{0}', space=vmem, size = 0x400, scoped, tag = 'input window, operand 0, single buffered']
    #allocation4 [shape = 's32[1]{0}', space=sflag, size = 0x4, scoped, tag = 'scoped memory for tpu_custom_call.1']
    #allocation5 [shape = 's32[1]{0}', space=sflag, size = 0x4, scoped, tag = 'scoped memory for tpu_custom_call.1']
    #allocation6 [shape = 'u8[28672]{0}', space=vmem, size = 0x7000, scoped, tag = 'input window, operand 1, single buffered']
    #allocation7 [shape = 's32[1]{0}', space=sflag, size = 0x4, scoped, tag = 'scoped memory for tpu_custom_call.1']
    #allocation8 [shape = 'u8[1024]{0}', space=vmem, size = 0x400, scoped, tag = 'output window, operand 0, single buffered']
    %8 = vsyncpa [#allocation4], 0
    %9 = vsyncpa [#allocation7], 0
    %10 = vsyncpa [#allocation5], 0
    // Predicated region
    $region2: #{tpu_custom_call.1} parent=1 // pred_check
      _
    $region3: #{tpu_custom_call.1} parent=1 // pred_check_branch
      %12 = sbr.rel (0) target = $region5
    $region4: #{tpu_custom_call.1} parent=1 // pred_region
      %14 = vsyncadd [#allocation4], 0
      %s16 = sshll.u32 %s0, 4
      %s17 = int_to_ptr.hbm [resolvable:$true] %s16
      %s18 = sshll.u32 [#allocation3], 4
      %s19 = int_to_ptr.vmem [resolvable:$true] %s18
      %21 = dma.hbm_to_vmem [thread:$0]  %s17, 32, %s19, [#allocation4]
    $region5: #{tpu_custom_call.1} parent=1 // pred_fallthru
      _
    // Predicated region
    $region6: #{tpu_custom_call.1} parent=1 // pred_check
      _
    $region7: #{tpu_custom_call.1} parent=1 // pred_check_branch
      %23 = sbr.rel (0) target = $region9
    $region8: #{tpu_custom_call.1} parent=1 // pred_region
      %25 = vsyncadd [#allocation7], 0
      %s26 = sshll.u32 %s1, 4
      %s27 = int_to_ptr.hbm [resolvable:$true] %s26
      %s28 = sshll.u32 [#allocation6], 4
      %s29 = int_to_ptr.vmem [resolvable:$true] %s28
      %34 = dma.hbm_to_vmem [thread:$0]  %s27, 896, %s29, [#allocation7], 128, 128, 8
    $region9: #{tpu_custom_call.1} parent=1 // pred_fallthru
      _
    // Predicated region
    $region10: #{tpu_custom_call.1} parent=1 // pred_check
      _
    $region11: #{tpu_custom_call.1} parent=1 // pred_check_branch
      %36 = sbr.rel (0) target = $region13
    $region12: #{tpu_custom_call.1} parent=1 // pred_region
      _
    $region13: #{tpu_custom_call.1} parent=1 // pred_fallthru
      _
    // Predicated region
    $region14: #{tpu_custom_call.1} parent=1 // pred_check
      _
    $region15: #{tpu_custom_call.1} parent=1 // pred_check_branch
      %38 = sbr.rel (0) target = $region17
    $region16: #{tpu_custom_call.1} parent=1 // pred_region
      %40 = dma.done [#allocation4], 32
    $region17: #{tpu_custom_call.1} parent=1 // pred_fallthru
      _
    // Predicated region
    $region18: #{tpu_custom_call.1} parent=1 // pred_check
      _
    $region19: #{tpu_custom_call.1} parent=1 // pred_check_branch
      %42 = sbr.rel (0) target = $region21
    $region20: #{tpu_custom_call.1} parent=1 // pred_region
      %44 = dma.done [#allocation7], 896
    $region21: #{tpu_custom_call.1} parent=1 // pred_fallthru
      _
    %p45 = scmp.eq.s32.totalorder 0, 0
    // Predicated region
    $region22: #{tpu_custom_call.1} parent=1 // pred_check
      %p46 = pneg %p45
    $region23: #{tpu_custom_call.1} parent=1 // pred_check_branch
      %48 = sbr.rel (%p46) target = $region25
    $region24: #{tpu_custom_call.1} parent=1 // pred_region
      %49 = vst [vmem:[#allocation2] sm:$0x3] 0.0
    $region25: #{tpu_custom_call.1} parent=1 // pred_fallthru
      _
    %v50 = vld [vmem:[#allocation2] sm:$0x3]
    %v51 = vld [vmem:[#allocation3] sm:$0x3]
    %v52 = vld [vmem:[#allocation6] sm:$0xff]
    %v53 = vld [vmem:[#allocation6 + $0x8] sm:$0xff]
    %v54 = vld [vmem:[#allocation6 + $0x10] sm:$0xff]
    %v55 = vld [vmem:[#allocation6 + $0x18] sm:$0xff]
    %v56 = vld [vmem:[#allocation6 + $0x20] sm:$0xff]
    %v57 = vld [vmem:[#allocation6 + $0x28] sm:$0xff]
    %v58 = vld [vmem:[#allocation6 + $0x30] sm:$0xff]
    %vm59 = vcmask 457728
    %v61 = vsel %vm59, %v51, 0
    %63 = vmatpush.msra.mxu0 0.0
    %64 = vmatpush.msra.mxu0 0.0
    %65 = vmatpush.msra.mxu0 0.0
    %66 = vmatpush.msra.mxu0 0.0
    %67 = vmatpush.msra.mxu0 0.0
    %68 = vmatpush.msra.mxu0 0.0
    %69 = vmatpush.msra.mxu0 0.0
    %70 = vmatpush.msra.mxu0 0.0
    %71 = vmatpush.msra.mxu0 0.0
    %72 = vmatpush.msra.mxu0 %v58
    %73 = vmatpush.msra.mxu0 %v57
    %74 = vmatpush.msra.mxu0 %v56
    %75 = vmatpush.msra.mxu0 %v55
    %76 = vmatpush.msra.mxu0 %v54
    %77 = vmatpush.msra.mxu0 %v53
    %78 = vmatpush.msra.mxu0 %v52
    %79 = vmatmul.f32.gmra.mxu0 %v61
    %v80 = vpop.f32.mrf.mxu0
    %v81 = vadd.f32 0.0, %v80
    %82 = vdwg.mxu0
    %v83 = vadd.f32 %v50, %v81
    %84 = vst [vmem:[#allocation2] sm:$0x3] %v83
    // Predicated region
    $region26: #{tpu_custom_call.1} parent=1 // pred_check
      %p85 = pneg %p45
    $region27: #{tpu_custom_call.1} parent=1 // pred_check_branch
      %87 = sbr.rel (%p85) target = $region29
    $region28: #{tpu_custom_call.1} parent=1 // pred_region
      %v88 = vld [vmem:[#allocation2] sm:$0x3]
      %v89 = vld [vmem:[%s2] sm:$0x1]
      %v91 = vperm.slane %v89, 0
      %v93 = vadd.f32 %v88, %v91
      %94 = vst [vmem:[#allocation8] sm:$0x3] %v93
    $region29: #{tpu_custom_call.1} parent=1 // pred_fallthru
      _
    // Predicated region
    $region30: #{tpu_custom_call.1} parent=1 // pred_check
      _
    $region31: #{tpu_custom_call.1} parent=1 // pred_check_branch
      %96 = sbr.rel (0) target = $region33
    $region32: #{tpu_custom_call.1} parent=1 // pred_region
      %98 = vsyncadd [#allocation5], 0
      %s100 = sshll.u32 [#allocation8], 4
      %s101 = int_to_ptr.vmem [resolvable:$true] %s100
      %s102 = sshll.u32 %s3, 4
      %s103 = int_to_ptr.hbm [resolvable:$true] %s102
      %105 = dma.vmem_to_hbm [thread:$0]  %s101, 32, %s103, [#allocation5]
    $region33: #{tpu_custom_call.1} parent=1 // pred_fallthru
      _
    // Predicated region
    $region34: #{tpu_custom_call.1} parent=1 // pred_check
      _
    $region35: #{tpu_custom_call.1} parent=1 // pred_check_branch
      %107 = sbr.rel (0) target = $region37
    $region36: #{tpu_custom_call.1} parent=1 // pred_region
      %109 = dma.done [#allocation5], 32
    $region37: #{tpu_custom_call.1} parent=1 // pred_fallthru
      _
    %110 = vsyncpa [#allocation4], 1
    %111 = vsyncpa [#allocation7], 1
    %112 = vsyncpa [#allocation5], 1

</llo_original>
